<compile_context>
chip_gen: v5e
topology: v5e:2x2
jax: 0.10.0
libtpu: 0.0.40
codegen_flags: <defaults>
</compile_context>

<pallas_src>
import functools

import jax
import jax.numpy as jnp
from jax.experimental import pallas as pl
from jax.experimental.pallas import tpu as pltpu


def _round_up(v, m):
    return m * ((v + m - 1) // m)


def ffn_hidden_dim(dim: int, multiple_of: int, ffn_dim_multiplier=None) -> int:
    """Reproduces the hidden_dim computation from FeedForward.__init__."""
    hidden_dim = 4 * dim
    hidden_dim = int(2 * hidden_dim / 3)
    if ffn_dim_multiplier is not None:
        hidden_dim = int(ffn_dim_multiplier * hidden_dim)
    return multiple_of * ((hidden_dim + multiple_of - 1) // multiple_of)


# Headroom under v7x's 64 MiB physical VMEM; also fine for v5e/v6e (128 MiB).
_VMEM_BUDGET = 48 * 1024 * 1024


def _pick_hidden_tile(H: int, preferred: int) -> int:
    """Largest multiple of 128 that divides H and is <= preferred (fallback: H)."""
    if H < 128 or H % 128 != 0:
        return H
    t = min((preferred // 128) * 128, H)
    while t >= 128:
        if H % t == 0:
            return t
        t -= 128
    return H


def _vmem_estimate(tm, th, D, x_bytes, w_bytes, o_bytes):
    """Rough VMEM usage of one pipelined grid step (double-buffered operands)."""
    return (2 * tm * D * x_bytes          # x tile (double-buffered)
            + 2 * 3 * D * th * w_bytes    # w1/w3 (D,th) + w2 (th,D), double-buffered
            + 2 * tm * D * o_bytes        # output tile (double-buffered)
            + tm * D * 4                  # f32 accumulator scratch
            + 3 * tm * th * 4)            # h1 / h3 / h f32 intermediates


def prepare_ffn_weights(w1, w2, w3, compute_dtype=jnp.bfloat16):
    """One-time weight prep (NOT the per-call path).

    Takes PyTorch nn.Linear weights in (out_features, in_features) layout,
    returns (in, out)-layout bf16 weights for the kernel:
      w1_t, w3_t: (D, H);  w2_t: (H, D)
    """
    w1_t = jnp.asarray(w1).T.astype(compute_dtype)
    w3_t = jnp.asarray(w3).T.astype(compute_dtype)
    w2_t = jnp.asarray(w2).T.astype(compute_dtype)
    return w1_t, w3_t, w2_t


def _ffn_kernel(x_ref, w1_ref, w3_ref, w2_ref, o_ref, acc_ref):
    # x_ref:  (tm, D)  bf16 token tile          (invariant over the H axis)
    # w1_ref: (D, th)  gate projection slab
    # w3_ref: (D, th)  up   projection slab
    # w2_ref: (th, D)  down projection slab
    # o_ref:  (tm, D)  output tile (written only at the last H step)
    # acc_ref:(tm, D)  f32 VMEM accumulator
    h_idx = pl.program_id(1)

    @pl.when(h_idx == 0)
    def _init():
        acc_ref[...] = jnp.zeros_like(acc_ref)

    x = x_ref[...]
    h1 = jnp.dot(x, w1_ref[...], preferred_element_type=jnp.float32)  # (tm, th) f32
    h3 = jnp.dot(x, w3_ref[...], preferred_element_type=jnp.float32)  # (tm, th) f32
    # SiLU(h1) * h3 in f32: sigmoid -> EUP slot, multiplies -> VPU slot
    # (both have slack under the MXU).
    h = (h1 * jax.nn.sigmoid(h1)) * h3
    acc_ref[...] += jnp.dot(h.astype(w2_ref.dtype), w2_ref[...],
                            preferred_element_type=jnp.float32)

    @pl.when(h_idx == pl.num_programs(1) - 1)
    def _finalize():
        o_ref[...] = acc_ref[...].astype(o_ref.dtype)


@functools.partial(jax.jit, static_argnames=("tm_pref", "th_pref"))
def feed_forward(x, w1_t, w3_t, w2_t, *, tm_pref=256, th_pref=1024):
    """x: (B, S, D). w1_t/w3_t: (D, H); w2_t: (H, D) -- pre-transposed bf16."""
    B, S, D = x.shape
    H = w1_t.shape[1]
    M = B * S

    compute_dtype = w1_t.dtype
    x2d = x.reshape(M, D).astype(compute_dtype)

    x_bytes = jnp.dtype(compute_dtype).itemsize
    o_bytes = jnp.dtype(x.dtype).itemsize

    # Token tile: >=256 preferred (fills the 256-wide MXU on v6e/v7x), clamped
    # to the (8-aligned) token count for small M.
    tm = min(tm_pref, _round_up(M, 8))
    # Hidden tile: multiple of 128 dividing H.
    th = _pick_hidden_tile(H, th_pref)

    # Shrink tiles until the VMEM estimate fits the budget (keeps the kernel
    # compileable on v7x's 64 MiB VMEM and under scoped limits everywhere).
    while _vmem_estimate(tm, th, D, x_bytes, x_bytes, o_bytes) > _VMEM_BUDGET:
        if th > 128 and H % 128 == 0:
            new_th = _pick_hidden_tile(H, th // 2)
            if new_th < th:
                th = new_th
                continue
        if tm > 8:
            tm = max(8, (tm // 2) // 8 * 8)
            continue
        break

    num_m = pl.cdiv(M, tm)
    num_h = H // th

    out = pl.pallas_call(
        _ffn_kernel,
        out_shape=jax.ShapeDtypeStruct((M, D), x.dtype),
        grid_spec=pltpu.PrefetchScalarGridSpec(
            num_scalar_prefetch=0,
            grid=(num_m, num_h),                              # reduction axis last
            in_specs=[
                pl.BlockSpec((tm, D), lambda i, h: (i, 0)),   # x tile
                pl.BlockSpec((D, th), lambda i, h: (0, h)),   # w1^T slab
                pl.BlockSpec((D, th), lambda i, h: (0, h)),   # w3^T slab
                pl.BlockSpec((th, D), lambda i, h: (h, 0)),   # w2^T slab
            ],
            out_specs=pl.BlockSpec((tm, D), lambda i, h: (i, 0)),
            scratch_shapes=[pltpu.VMEM((tm, D), jnp.float32)],
        ),
        compiler_params=pltpu.CompilerParams(
            dimension_semantics=("parallel", "arbitrary"),
            vmem_limit_bytes=64 * 1024 * 1024,
        ),
    )(x2d, w1_t, w3_t, w2_t)

    return out.reshape(B, S, D)


if __name__ == "__main__":
    # Small, TPU-friendly config: dim=256, multiple_of=128 -> hidden=768.
    dim = 256
    multiple_of = 128
    hidden = ffn_hidden_dim(dim, multiple_of)  # = 768
    batch, seq = 2, 8

    key = jax.random.PRNGKey(0)
    kx, k1, k2, k3 = jax.random.split(key, 4)

    x = jax.random.normal(kx, (batch, seq, dim), dtype=jnp.float32)
    # nn.Linear weight layout: (out_features, in_features), no bias.
    w1 = jax.random.normal(k1, (hidden, dim), dtype=jnp.float32) / (dim ** 0.5)
    w2 = jax.random.normal(k2, (dim, hidden), dtype=jnp.float32) / (hidden ** 0.5)
    w3 = jax.random.normal(k3, (hidden, dim), dtype=jnp.float32) / (dim ** 0.5)

    # One-time weight prep (transpose + bf16 cast) -- not in the hot path.
    w1_t, w3_t, w2_t = prepare_ffn_weights(w1, w2, w3)

    # th_pref=256 -> 3 hidden-dim tiles, so the accumulate/reduce path runs.
    out = feed_forward(x, w1_t, w3_t, w2_t, th_pref=256)
    jax.block_until_ready(out)
    assert out.shape == (batch, seq, dim)

    # Reference 1: identical bf16 operands + f32 accumulation (matches kernel
    # numerics; differences come only from accumulation order).
    xb = x.astype(jnp.bfloat16)
    r1 = jnp.dot(xb.reshape(-1, dim), w1_t, preferred_element_type=jnp.float32)
    r3 = jnp.dot(xb.reshape(-1, dim), w3_t, preferred_element_type=jnp.float32)
    rh = (jax.nn.silu(r1) * r3).astype(jnp.bfloat16)
    ref_bf16 = jnp.dot(rh, w2_t, preferred_element_type=jnp.float32)
    ref_bf16 = ref_bf16.reshape(batch, seq, dim).astype(x.dtype)
    assert jnp.allclose(out, ref_bf16, atol=2e-2, rtol=2e-2), "mismatch vs bf16 reference"

    # Reference 2 (loose): full-f32 PyTorch-semantics reference.
    hp = jax.lax.Precision.HIGHEST
    ref32 = jnp.matmul(
        jax.nn.silu(jnp.matmul(x, w1.T, precision=hp)) * jnp.matmul(x, w3.T, precision=hp),
        w2.T, precision=hp)
    assert jnp.allclose(out, ref32, atol=1.5e-1, rtol=1.5e-1), "mismatch vs f32 reference"

    print("KERNEL_OK")
</pallas_src>

<mosaic_0001>
module attributes {stable_mosaic.version = 11 : i64} {
  func.func @_ffn_kernel(%arg0: i32, %arg1: i32, %arg2: memref<16x256xbf16, #tpu.memory_space<vmem>>, %arg3: memref<256x256xbf16, #tpu.memory_space<vmem>>, %arg4: memref<256x256xbf16, #tpu.memory_space<vmem>>, %arg5: memref<256x256xbf16, #tpu.memory_space<vmem>>, %arg6: memref<16x256xf32, #tpu.memory_space<vmem>>, %arg7: memref<16x256xf32, #tpu.memory_space<vmem>>) attributes {dimension_semantics = [#tpu.dimension_semantics<parallel>, #tpu.dimension_semantics<arbitrary>], iteration_bounds = array<i64: 1, 3>, scalar_prefetch = 0 : i64, scratch_operands = 1 : i64, tpu.core_type = #tpu.core_type<tc>, window_params = [{transform_indices = @transform_0, window_bounds = array<i64: 16, 256>}, {transform_indices = @transform_1, window_bounds = array<i64: 256, 256>}, {transform_indices = @transform_2, window_bounds = array<i64: 256, 256>}, {transform_indices = @transform_3, window_bounds = array<i64: 256, 256>}, {transform_indices = @transform_4, window_bounds = array<i64: 16, 256>}]} {
    %c0_i32 = arith.constant 0 : i32
    %0 = arith.cmpi eq, %arg1, %c0_i32 : i32
    %1 = arith.extui %0 : i1 to i32
    %c0_i32_0 = arith.constant 0 : i32
    %2 = arith.cmpi ne, %1, %c0_i32_0 : i32
    scf.if %2 {
      %cst_16 = arith.constant 0.000000e+00 : f32
      %24 = vector.broadcast %cst_16 : f32 to vector<16x256xf32>
      %c0_17 = arith.constant 0 : index
      %c0_18 = arith.constant 0 : index
      %25 = vector.load %arg7[%c0_17, %c0_18] : memref<16x256xf32, #tpu.memory_space<vmem>>, vector<16x256xf32>
      tpu.vector_store %arg7[%c0_17, %c0_18], %24 {strides = array<i32>} : memref<16x256xf32, #tpu.memory_space<vmem>>, vector<16x256xf32>,
    } else {
    }
    %c0 = arith.constant 0 : index
    %c0_1 = arith.constant 0 : index
    %3 = vector.load %arg2[%c0, %c0_1] : memref<16x256xbf16, #tpu.memory_space<vmem>>, vector<16x256xbf16>
    %c0_2 = arith.constant 0 : index
    %c0_3 = arith.constant 0 : index
    %4 = vector.load %arg3[%c0_2, %c0_3] : memref<256x256xbf16, #tpu.memory_space<vmem>>, vector<256x256xbf16>
    %cst = arith.constant dense<0.000000e+00> : vector<16x256xf32>
    %5 = tpu.matmul %3, %4, %cst {dimension_numbers = #tpu.dot_dimension_numbers<[1], [0], [0], [1], [0, 0, 1, 1], [], []>} : vector<16x256xbf16>, vector<256x256xbf16>, vector<16x256xf32> -> vector<16x256xf32>
    %c0_4 = arith.constant 0 : index
    %c0_5 = arith.constant 0 : index
    %6 = vector.load %arg4[%c0_4, %c0_5] : memref<256x256xbf16, #tpu.memory_space<vmem>>, vector<256x256xbf16>
    %cst_6 = arith.constant dense<0.000000e+00> : vector<16x256xf32>
    %7 = tpu.matmul %3, %6, %cst_6 {dimension_numbers = #tpu.dot_dimension_numbers<[1], [0], [0], [1], [0, 0, 1, 1], [], []>} : vector<16x256xbf16>, vector<256x256xbf16>, vector<16x256xf32> -> vector<16x256xf32>
    %8 = arith.negf %5 : vector<16x256xf32>
    %9 = math.exp %8 : vector<16x256xf32>
    %cst_7 = arith.constant 1.000000e+00 : f32
    %10 = vector.broadcast %cst_7 : f32 to vector<16x256xf32>
    %11 = arith.addf %10, %9 : vector<16x256xf32>
    %12 = arith.divf %10, %11 : vector<16x256xf32>
    %13 = arith.mulf %5, %12 : vector<16x256xf32>
    %14 = arith.mulf %13, %7 : vector<16x256xf32>
    %c0_8 = arith.constant 0 : index
    %c0_9 = arith.constant 0 : index
    %15 = vector.load %arg7[%c0_8, %c0_9] : memref<16x256xf32, #tpu.memory_space<vmem>>, vector<16x256xf32>
    %16 = arith.truncf %14 : vector<16x256xf32> to vector<16x256xbf16>
    %c0_10 = arith.constant 0 : index
    %c0_11 = arith.constant 0 : index
    %17 = vector.load %arg5[%c0_10, %c0_11] : memref<256x256xbf16, #tpu.memory_space<vmem>>, vector<256x256xbf16>
    %cst_12 = arith.constant dense<0.000000e+00> : vector<16x256xf32>
    %18 = tpu.matmul %16, %17, %cst_12 {dimension_numbers = #tpu.dot_dimension_numbers<[1], [0], [0], [1], [0, 0, 1, 1], [], []>} : vector<16x256xbf16>, vector<256x256xbf16>, vector<16x256xf32> -> vector<16x256xf32>
    %19 = arith.addf %15, %18 : vector<16x256xf32>
    %c0_13 = arith.constant 0 : index
    %c0_14 = arith.constant 0 : index
    %20 = vector.load %arg7[%c0_13, %c0_14] : memref<16x256xf32, #tpu.memory_space<vmem>>, vector<16x256xf32>
    tpu.vector_store %arg7[%c0_13, %c0_14], %19 {strides = array<i32>} : memref<16x256xf32, #tpu.memory_space<vmem>>, vector<16x256xf32>,
    %c2_i32 = arith.constant 2 : i32
    %21 = arith.cmpi eq, %arg1, %c2_i32 : i32
    %22 = arith.extui %21 : i1 to i32
    %c0_i32_15 = arith.constant 0 : i32
    %23 = arith.cmpi ne, %22, %c0_i32_15 : i32
    scf.if %23 {
      %c0_16 = arith.constant 0 : index
      %c0_17 = arith.constant 0 : index
      %24 = vector.load %arg7[%c0_16, %c0_17] : memref<16x256xf32, #tpu.memory_space<vmem>>, vector<16x256xf32>
      %c0_18 = arith.constant 0 : index
      %c0_19 = arith.constant 0 : index
      %25 = vector.load %arg6[%c0_18, %c0_19] : memref<16x256xf32, #tpu.memory_space<vmem>>, vector<16x256xf32>
      tpu.vector_store %arg6[%c0_18, %c0_19], %24 {strides = array<i32>} : memref<16x256xf32, #tpu.memory_space<vmem>>, vector<16x256xf32>,
    } else {
    }
    return
  }
  func.func @transform_0(%arg0: i32, %arg1: i32) -> (i32, i32) {
    %c0_i32 = arith.constant 0 : i32
    %c0_i32_0 = arith.constant 0 : i32
    return %arg0, %c0_i32 : i32, i32
  }
  func.func @transform_1(%arg0: i32, %arg1: i32) -> (i32, i32) {
    %c0_i32 = arith.constant 0 : i32
    %c0_i32_0 = arith.constant 0 : i32
    return %c0_i32, %arg1 : i32, i32
  }
  func.func @transform_2(%arg0: i32, %arg1: i32) -> (i32, i32) {
    %c0_i32 = arith.constant 0 : i32
    %c0_i32_0 = arith.constant 0 : i32
    return %c0_i32, %arg1 : i32, i32
  }
  func.func @transform_3(%arg0: i32, %arg1: i32) -> (i32, i32) {
    %c0_i32 = arith.constant 0 : i32
    %c0_i32_0 = arith.constant 0 : i32
    return %arg1, %c0_i32 : i32, i32
  }
  func.func @transform_4(%arg0: i32, %arg1: i32) -> (i32, i32) {
    %c0_i32 = arith.constant 0 : i32
    %c0_i32_0 = arith.constant 0 : i32
    return %arg0, %c0_i32 : i32, i32
  }
}

</mosaic_0001>

<llo_original>
// kernel: feed_forward.1
$region0: #{feed_forward.1}
  #allocation0 [shape = 'u32[]', space=smem, size = 0x4, offset = 0x4, fixed_abs, tag = 'smem constant byte address 0x4 - core index']
  #allocation1 [shape = 'u32[72,128]{1,0:T(1,128)}', space=vmem, size = 0x9000, scoped, tag = 'internal scratch']
  #allocation2 [shape = 'f32[16,256]{1,0:T(8,128)}', space=vmem, size = 0x4000, scoped, tag = 'scratch operand']
  %s0 = inlined_call_operand.vmem [shape: bf16[16,256], index: 0, kind: input, shape index: {}]
  %s1 = inlined_call_operand.hbm [shape: bf16[256,768], index: 1, kind: input, shape index: {}]
  %s2 = inlined_call_operand.hbm [shape: bf16[256,768], index: 2, kind: input, shape index: {}]
  %s3 = inlined_call_operand.hbm [shape: bf16[768,256], index: 3, kind: input, shape index: {}]
  %s4 = inlined_call_operand.hbm [shape: f32[16,256], index: 4, kind: output, shape index: {}]
  %s5 = sld [smem:[#allocation0]]
  $region69: #{feed_forward.1} parent=0
    _
  %s7 = ssub.s32 1, %s5
  %s8 = scalar_select 0, %s7, %s5
  $region1: #{feed_forward.1} parent=0
    #allocation3 [shape = 'u8[262144]{0}', space=vmem, size = 0x40000, scoped, tag = 'input window, operand 1']
    #allocation4 [shape = 's32[2]{0}', space=sflag, size = 0x8, scoped, tag = 'scoped memory for feed_forward.1']
    #allocation5 [shape = 's32[2]{0}', space=sflag, size = 0x8, scoped, tag = 'scoped memory for feed_forward.1']
    #allocation6 [shape = 'u8[262144]{0}', space=vmem, size = 0x40000, scoped, tag = 'input window, operand 2']
    #allocation7 [shape = 's32[2]{0}', space=sflag, size = 0x8, scoped, tag = 'scoped memory for feed_forward.1']
    #allocation8 [shape = 'u8[262144]{0}', space=vmem, size = 0x40000, scoped, tag = 'input window, operand 3']
    #allocation9 [shape = 'u8[16384]{0}', space=vmem, size = 0x4000, scoped, tag = 'output window, operand 0, single buffered']
    %9 = vsyncpa [#allocation4], 0
    %s10 = scalar_lea.sflag [#allocation4], 1
    %11 = vsyncpa %s10, 0
    %12 = vsyncpa [#allocation7], 0
    %s13 = scalar_lea.sflag [#allocation7], 1
    %14 = vsyncpa %s13, 0
    %15 = vsyncpa [#allocation5], 0
    loop: start=0, step=1, limit=5
    $region2: #{feed_forward.1} parent=1 // loop_pre_header
      _
    $region3: #{feed_forward.1} parent=1 // loop_header
      %s17 = sphi 0, %s21
      %p18 = scmp.ge.s32.totalorder %s17, 5
      %s24 = sphi 0, %s36
      %s25 = sphi 0, %s32
      %s26 = sphi 0, %s24
      %s27 = sphi 0, %s25
      %s28 = sphi 0, %s26
      %s29 = sphi 0, %s27
      %s39 = sphi 0, %s41
      %s42 = sphi 0, %s39
      %s43 = sphi 0, %s42
      %s59 = sphi 0, %s43
      %s65 = sphi 0, %s67
      %s68 = sphi 0, %s65
      %s69 = sphi 0, %s68
      %s85 = sphi 0, %s69
      %s91 = sphi 0, %s93
      %s94 = sphi 0, %s91
      %s95 = sphi 0, %s94
      %s111 = sphi 0, %s95
      %s117 = sphi 0, %s119
      %s120 = sphi 0, %s117
      %s121 = sphi 0, %s120
      %s137 = sphi 0, %s121
      %s143 = sphi 0, %s145
      %s146 = sphi 0, %s143
      %s147 = sphi 0, %s146
      %s163 = sphi 0, %s147
    $region4: #{feed_forward.1} parent=1 // loop_header_branch
      %20 = sbr.rel (%p18) target = $region8
    $region5: #{feed_forward.1} parent=1 // loop_body
      %s22 = ssub.s32 %s17, 1
      %s23 = ssub.s32 %s17, 2
      %s30 = sadd.s32 1, %s25
      %p31 = scmp.ge.s32.totalorder %s30, 3
      %s32 = scalar_select %p31, 0, %s30
      %s33 = sadd.s32 1, %s24
      %s34 = scalar_select %p31, %s33, %s24
      %p35 = scmp.ge.s32.totalorder %s34, 1
      %s36 = scalar_select %p35, 0, %s34
      %s37 = ssub.s32 %s24, %s36
      %p38 = scmp.eq.s32.totalorder %s37, 0
      %s40 = sadd.s32 %s39, 1
      %s41 = scalar_select %p38, %s39, %s40
      %p44 = pneg %p38
      %p45 = scmp.eq.s32.totalorder %s17, 2
      %p46 = por %p44, %p45
      %p47 = scmp.ne.s32.totalorder %s39, %s42
      %p48 = scmp.eq.s32.totalorder %s17, 0
      %p49 = por %p47, %p48
      %p50 = scmp.ne.s32.totalorder %s39, %s42
      %p51 = scmp.eq.s32.totalorder %s22, 2
      %p52 = por %p50, %p51
      %p53 = scmp.ne.s32.totalorder %s42, %s43
      %p54 = scmp.eq.s32.totalorder %s22, 0
      %p55 = por %p53, %p54
      %p56 = scmp.ne.s32.totalorder %s42, %s43
      %p57 = scmp.eq.s32.totalorder %s23, 2
      %p58 = por %p56, %p57
      %p60 = scmp.ne.s32.totalorder %s43, %s59
      %p61 = scmp.eq.s32.totalorder %s23, 0
      %p62 = por %p60, %p61
      %s63 = ssub.s32 %s25, %s32
      %p64 = scmp.eq.s32.totalorder %s63, 0
      %s66 = sadd.s32 %s65, 1
      %s67 = scalar_select %p64, %s65, %s66
      %p70 = pneg %p64
      %p71 = scmp.eq.s32.totalorder %s17, 2
      %p72 = por %p70, %p71
      %p73 = scmp.ne.s32.totalorder %s65, %s68
      %p74 = scmp.eq.s32.totalorder %s17, 0
      %p75 = por %p73, %p74
      %p76 = scmp.ne.s32.totalorder %s65, %s68
      %p77 = scmp.eq.s32.totalorder %s22, 2
      %p78 = por %p76, %p77
      %p79 = scmp.ne.s32.totalorder %s68, %s69
      %p80 = scmp.eq.s32.totalorder %s22, 0
      %p81 = por %p79, %p80
      %p82 = scmp.ne.s32.totalorder %s68, %s69
      %p83 = scmp.eq.s32.totalorder %s23, 2
      %p84 = por %p82, %p83
      %p86 = scmp.ne.s32.totalorder %s69, %s85
      %p87 = scmp.eq.s32.totalorder %s23, 0
      %p88 = por %p86, %p87
      %s89 = ssub.s32 %s25, %s32
      %p90 = scmp.eq.s32.totalorder %s89, 0
      %s92 = sadd.s32 %s91, 1
      %s93 = scalar_select %p90, %s91, %s92
      %p96 = pneg %p90
      %p97 = scmp.eq.s32.totalorder %s17, 2
      %p98 = por %p96, %p97
      %p99 = scmp.ne.s32.totalorder %s91, %s94
      %p100 = scmp.eq.s32.totalorder %s17, 0
      %p101 = por %p99, %p100
      %p102 = scmp.ne.s32.totalorder %s91, %s94
      %p103 = scmp.eq.s32.totalorder %s22, 2
      %p104 = por %p102, %p103
      %p105 = scmp.ne.s32.totalorder %s94, %s95
      %p106 = scmp.eq.s32.totalorder %s22, 0
      %p107 = por %p105, %p106
      %p108 = scmp.ne.s32.totalorder %s94, %s95
      %p109 = scmp.eq.s32.totalorder %s23, 2
      %p110 = por %p108, %p109
      %p112 = scmp.ne.s32.totalorder %s95, %s111
      %p113 = scmp.eq.s32.totalorder %s23, 0
      %p114 = por %p112, %p113
      %s115 = ssub.s32 %s25, %s32
      %p116 = scmp.eq.s32.totalorder %s115, 0
      %s118 = sadd.s32 %s117, 1
      %s119 = scalar_select %p116, %s117, %s118
      %p122 = pneg %p116
      %p123 = scmp.eq.s32.totalorder %s17, 2
      %p124 = por %p122, %p123
      %p125 = scmp.ne.s32.totalorder %s117, %s120
      %p126 = scmp.eq.s32.totalorder %s17, 0
      %p127 = por %p125, %p126
      %p128 = scmp.ne.s32.totalorder %s117, %s120
      %p129 = scmp.eq.s32.totalorder %s22, 2
      %p130 = por %p128, %p129
      %p131 = scmp.ne.s32.totalorder %s120, %s121
      %p132 = scmp.eq.s32.totalorder %s22, 0
      %p133 = por %p131, %p132
      %p134 = scmp.ne.s32.totalorder %s120, %s121
      %p135 = scmp.eq.s32.totalorder %s23, 2
      %p136 = por %p134, %p135
      %p138 = scmp.ne.s32.totalorder %s121, %s137
      %p139 = scmp.eq.s32.totalorder %s23, 0
      %p140 = por %p138, %p139
      %s141 = ssub.s32 %s24, %s36
      %p142 = scmp.eq.s32.totalorder %s141, 0
      %s144 = sadd.s32 %s143, 1
      %s145 = scalar_select %p142, %s143, %s144
      %p148 = pneg %p142
      %p149 = scmp.eq.s32.totalorder %s17, 2
      %p150 = por %p148, %p149
      %p151 = scmp.ne.s32.totalorder %s143, %s146
      %p152 = scmp.eq.s32.totalorder %s17, 0
      %p153 = por %p151, %p152
      %p154 = scmp.ne.s32.totalorder %s143, %s146
      %p155 = scmp.eq.s32.totalorder %s22, 2
      %p156 = por %p154, %p155
      %p157 = scmp.ne.s32.totalorder %s146, %s147
      %p158 = scmp.eq.s32.totalorder %s22, 0
      %p159 = por %p157, %p158
      %p160 = scmp.ne.s32.totalorder %s146, %s147
      %p161 = scmp.eq.s32.totalorder %s23, 2
      %p162 = por %p160, %p161
      %p164 = scmp.ne.s32.totalorder %s147, %s163
      %p165 = scmp.eq.s32.totalorder %s23, 0
      %p166 = por %p164, %p165
      %p167 = scmp.le.s32.totalorder 1, %s17
      %p168 = scmp.lt.s32.totalorder %s17, 4
      %p169 = pnand %p167, %p168
      %p170 = pneg %p169
      // Predicated region
      $region9: #{feed_forward.1} parent=5 // pred_check
        _
      $region10: #{feed_forward.1} parent=5 // pred_check_branch
        %172 = sbr.rel (%p169) target = $region12
      $region11: #{feed_forward.1} parent=5 // pred_region
        %s173 = ssub.s32 %s17, 1
        // Predicated region
        $region13: #{feed_forward.1} parent=11 // pred_check
          %p174 = pneg %p55
        $region14: #{feed_forward.1} parent=11 // pred_check_branch
          %176 = sbr.rel (%p174) target = $region16
        $region15: #{feed_forward.1} parent=11 // pred_region
          %s177 = smul.u32 2, %s26
          %p178 = scmp.lt.s32.totalorder %s177, 1
          %s179 = scalar_select %p178, %s177, 1
          %s180 = smul.addr %s179, 2
          %s181 = smul.addr %s180, 4
          %s182 = scalar_lea.vmem %s0, %s181
          %s183 = smul.u32 2, %s26
        $region16: #{feed_forward.1} parent=11 // pred_fallthru
          _
      $region12: #{feed_forward.1} parent=5 // pred_fallthru
        _
      %p184 = scmp.lt.s32.totalorder %s17, 3
      // Predicated region
      $region17: #{feed_forward.1} parent=5 // pred_check
        %p185 = pneg %p184
      $region18: #{feed_forward.1} parent=5 // pred_check_branch
        %187 = sbr.rel (%p185) target = $region20
      $region19: #{feed_forward.1} parent=5 // pred_region
        // Predicated region
        $region21: #{feed_forward.1} parent=19 // pred_check
          %p188 = pneg %p75
        $region22: #{feed_forward.1} parent=19 // pred_check_branch
          %190 = sbr.rel (%p188) target = $region24
        $region23: #{feed_forward.1} parent=19 // pred_region
          %s191 = sand.u32 %s65, 1
          %s192 = scalar_lea.sflag [#allocation4], %s191
          %s193 = sand.u32 %s65, 1
          %s194 = smul.addr %s193, 256
          %s195 = scalar_lea.vmem [#allocation3], %s194
          %s196 = smul.u32 2, %s25
          %198 = vsyncadd %s192, 0
          %s199 = smul.addr %s196, 4
          %s200 = scalar_lea.hbm %s1, %s199
          %s201 = sshll.u32 %s200, 4
          %s202 = int_to_ptr.hbm [resolvable:$true] %s201
          %s203 = sshll.u32 %s195, 4
          %s204 = int_to_ptr.vmem [resolvable:$true] %s203
          %209 = dma.hbm_to_vmem [thread:$0]  %s202, 4096, %s204, %s192, 384, 128, 8
        $region24: #{feed_forward.1} parent=19 // pred_fallthru
          _
        // Predicated region
        $region25: #{feed_forward.1} parent=19 // pred_check
          %p210 = pneg %p101
        $region26: #{feed_forward.1} parent=19 // pred_check_branch
          %212 = sbr.rel (%p210) target = $region28
        $region27: #{feed_forward.1} parent=19 // pred_region
          %s213 = sand.u32 %s17, 1
          %s214 = scalar_lea.sflag [#allocation7], %s213
          %s215 = sand.u32 %s91, 1
          %s216 = smul.addr %s215, 256
          %s217 = scalar_lea.vmem [#allocation6], %s216
          %s218 = smul.u32 2, %s25
          %220 = vsyncadd %s214, 0
          %s221 = smul.addr %s218, 4
          %s222 = scalar_lea.hbm %s2, %s221
          %s223 = sshll.u32 %s222, 4
          %s224 = int_to_ptr.hbm [resolvable:$true] %s223
          %s225 = sshll.u32 %s217, 4
          %s226 = int_to_ptr.vmem [resolvable:$true] %s225
          %231 = dma.hbm_to_vmem [thread:$0]  %s224, 4096, %s226, %s214, 384, 128, 8
        $region28: #{feed_forward.1} parent=19 // pred_fallthru
          _
        // Predicated region
        $region29: #{feed_forward.1} parent=19 // pred_check
          %p232 = pneg %p127
        $region30: #{feed_forward.1} parent=19 // pred_check_branch
          %234 = sbr.rel (%p232) target = $region32
        $region31: #{feed_forward.1} parent=19 // pred_region
          %s235 = sand.u32 %s17, 1
          %s236 = scalar_lea.sflag [#allocation7], %s235
          %s237 = sand.u32 %s117, 1
          %s238 = smul.addr %s237, 256
          %s239 = scalar_lea.vmem [#allocation8], %s238
          %s240 = smul.u32 32, %s25
          %242 = vsyncadd %s236, 0
          %s243 = smul.addr %s240, 2
          %s244 = smul.addr %s243, 4
          %s245 = scalar_lea.hbm %s3, %s244
          %s246 = sshll.u32 %s245, 4
          %s247 = int_to_ptr.hbm [resolvable:$true] %s246
          %s248 = sshll.u32 %s239, 4
          %s249 = int_to_ptr.vmem [resolvable:$true] %s248
          %254 = dma.hbm_to_vmem [thread:$0]  %s247, 4096, %s249, %s236, 128, 128, 8
        $region32: #{feed_forward.1} parent=19 // pred_fallthru
          _
      $region20: #{feed_forward.1} parent=5 // pred_fallthru
        _
      %p255 = scmp.le.s32.totalorder 1, %s17
      %p256 = scmp.lt.s32.totalorder %s17, 4
      %p257 = pnand %p255, %p256
      %p258 = pneg %p257
      // Predicated region
      $region33: #{feed_forward.1} parent=5 // pred_check
        _
      $region34: #{feed_forward.1} parent=5 // pred_check_branch
        %260 = sbr.rel (%p257) target = $region36
      $region35: #{feed_forward.1} parent=5 // pred_region
        %s261 = ssub.s32 %s17, 1
        %s262 = sand.u32 %s68, 1
        %s263 = scalar_lea.sflag [#allocation4], %s262
        %s264 = sand.u32 %s68, 1
        %s265 = smul.addr %s264, 256
        %s266 = scalar_lea.vmem [#allocation3], %s265
        // Predicated region
        $region37: #{feed_forward.1} parent=35 // pred_check
          %p267 = pneg %p81
        $region38: #{feed_forward.1} parent=35 // pred_check_branch
          %269 = sbr.rel (%p267) target = $region40
        $region39: #{feed_forward.1} parent=35 // pred_region
          %271 = dma.done %s263, 4096
        $region40: #{feed_forward.1} parent=35 // pred_fallthru
          _
        %s272 = sand.u32 %s22, 1
        %s273 = scalar_lea.sflag [#allocation7], %s272
        %s274 = sand.u32 %s94, 1
        %s275 = smul.addr %s274, 256
        %s276 = scalar_lea.vmem [#allocation6], %s275
        // Predicated region
        $region41: #{feed_forward.1} parent=35 // pred_check
          %p277 = pneg %p107
        $region42: #{feed_forward.1} parent=35 // pred_check_branch
          %279 = sbr.rel (%p277) target = $region44
        $region43: #{feed_forward.1} parent=35 // pred_region
          %281 = dma.done %s273, 4096
        $region44: #{feed_forward.1} parent=35 // pred_fallthru
          _
        %s282 = sand.u32 %s22, 1
        %s283 = scalar_lea.sflag [#allocation7], %s282
        %s284 = sand.u32 %s120, 1
        %s285 = smul.addr %s284, 256
        %s286 = scalar_lea.vmem [#allocation8], %s285
        // Predicated region
        $region45: #{feed_forward.1} parent=35 // pred_check
          %p287 = pneg %p133
        $region46: #{feed_forward.1} parent=35 // pred_check_branch
          %289 = sbr.rel (%p287) target = $region48
        $region47: #{feed_forward.1} parent=35 // pred_region
          %291 = dma.done %s283, 4096
        $region48: #{feed_forward.1} parent=35 // pred_fallthru
          _
        %s292 = smul.u32 2, %s26
        %p293 = scmp.lt.s32.totalorder %s292, 1
        %s294 = scalar_select %p293, %s292, 1
        %s295 = smul.addr %s294, 2
        %s296 = smul.addr %s295, 4
        %s297 = scalar_lea.vmem %s0, %s296
        %p298 = pneg %p55
        %p299 = pneg %p52
        %s300 = sand.u32 %s68, 1
        %s301 = scalar_lea.sflag [#allocation4], %s300
        %s302 = sand.u32 %s68, 1
        %s303 = smul.addr %s302, 256
        %s304 = scalar_lea.vmem [#allocation3], %s303
        %p305 = pneg %p81
        %p306 = pneg %p78
        %s307 = sand.u32 %s22, 1
        %s308 = scalar_lea.sflag [#allocation7], %s307
        %s309 = sand.u32 %s94, 1
        %s310 = smul.addr %s309, 256
        %s311 = scalar_lea.vmem [#allocation6], %s310
        %p312 = pneg %p107
        %p313 = pneg %p104
        %s314 = sand.u32 %s22, 1
        %s315 = scalar_lea.sflag [#allocation7], %s314
        %s316 = sand.u32 %s120, 1
        %s317 = smul.addr %s316, 256
        %s318 = scalar_lea.vmem [#allocation8], %s317
        %p319 = pneg %p133
        %p320 = pneg %p130
        %p321 = pneg %p159
        %p322 = pneg %p156
        %s323 = smul.u32 2, %s26
        %p324 = scmp.lt.s32.totalorder %s323, 1
        %s325 = scalar_select %p324, %s323, 1
        %s326 = smul.addr %s325, 2
        %s327 = smul.addr %s326, 4
        %s328 = scalar_lea.vmem %s0, %s327
        %s329 = smul.u32 2, %s26
        %s330 = smul.u32 2, %s27
        %s331 = smul.u32 2, %s27
        %s332 = smul.u32 32, %s27
        %s333 = smul.u32 2, %s26
        %p334 = scmp.eq.s32.totalorder %s27, 0
        // Predicated region
        $region49: #{feed_forward.1} parent=35 // pred_check
          %p335 = pneg %p334
        $region50: #{feed_forward.1} parent=35 // pred_check_branch
          %337 = sbr.rel (%p335) target = $region52
        $region51: #{feed_forward.1} parent=35 // pred_region
          %338 = vst [vmem:[#allocation2] sm:$0xff] 0.0
          %339 = vst [vmem:[#allocation2 + $0x8] sm:$0xff] 0.0
          %340 = vst [vmem:[#allocation2 + $0x10] sm:$0xff] 0.0
          %341 = vst [vmem:[#allocation2 + $0x18] sm:$0xff] 0.0
        $region52: #{feed_forward.1} parent=35 // pred_fallthru
          _
        %v342 = vld [vmem:[%s328] sm:$0xff]
        %v343 = vld [vmem:[%s328 + $0x8] sm:$0xff]
        %v344 = vld [vmem:[%s266] sm:$0xff]
        %v345 = vld [vmem:[%s266 + $0x8] sm:$0xff]
        %v346 = vld [vmem:[%s266 + $0x10] sm:$0xff]
        %v347 = vld [vmem:[%s266 + $0x18] sm:$0xff]
        %v348 = vld [vmem:[%s266 + $0x20] sm:$0xff]
        %v349 = vld [vmem:[%s266 + $0x28] sm:$0xff]
        %v350 = vld [vmem:[%s266 + $0x30] sm:$0xff]
        %v351 = vld [vmem:[%s266 + $0x38] sm:$0xff]
        %v352 = vld [vmem:[%s266 + $0x40] sm:$0xff]
        %v353 = vld [vmem:[%s266 + $0x48] sm:$0xff]
        %v354 = vld [vmem:[%s266 + $0x50] sm:$0xff]
        %v355 = vld [vmem:[%s266 + $0x58] sm:$0xff]
        %v356 = vld [vmem:[%s266 + $0x60] sm:$0xff]
        %v357 = vld [vmem:[%s266 + $0x68] sm:$0xff]
        %v358 = vld [vmem:[%s266 + $0x70] sm:$0xff]
        %v359 = vld [vmem:[%s266 + $0x78] sm:$0xff]
        %v360 = vld [vmem:[%s266 + $0x80] sm:$0xff]
        %v361 = vld [vmem:[%s266 + $0x88] sm:$0xff]
        %v362 = vld [vmem:[%s266 + $0x90] sm:$0xff]
        %v363 = vld [vmem:[%s266 + $0x98] sm:$0xff]
        %v364 = vld [vmem:[%s266 + $0xa0] sm:$0xff]
        %v365 = vld [vmem:[%s266 + $0xa8] sm:$0xff]
        %v366 = vld [vmem:[%s266 + $0xb0] sm:$0xff]
        %v367 = vld [vmem:[%s266 + $0xb8] sm:$0xff]
        %v368 = vld [vmem:[%s266 + $0xc0] sm:$0xff]
        %v369 = vld [vmem:[%s266 + $0xc8] sm:$0xff]
        %v370 = vld [vmem:[%s266 + $0xd0] sm:$0xff]
        %v371 = vld [vmem:[%s266 + $0xd8] sm:$0xff]
        %v372 = vld [vmem:[%s266 + $0xe0] sm:$0xff]
        %v373 = vld [vmem:[%s266 + $0xe8] sm:$0xff]
        %v374 = vld [vmem:[%s266 + $0xf0] sm:$0xff]
        %v375 = vld [vmem:[%s266 + $0xf8] sm:$0xff]
        %v378 = vunpack.c.l.b16 %v342
        %v379 = vunpack.c.h.b16 %v342
        %v380 = vunpack.c.l.b16 %v343
        %v381 = vunpack.c.h.b16 %v343
        %v382 = vpack.c.b16 %v380, %v378
        %v383 = vpack.c.b16 %v381, %v379
        %v418 = vunpack.c.l.b16 %v344
        %v419 = vunpack.c.h.b16 %v344
        %v420 = vunpack.c.l.b16 %v345
        %v421 = vunpack.c.h.b16 %v345
        %v422 = vunpack.c.l.b16 %v346
        %v423 = vunpack.c.h.b16 %v346
        %v424 = vunpack.c.l.b16 %v347
        %v425 = vunpack.c.h.b16 %v347
        %v426 = vunpack.c.l.b16 %v348
        %v427 = vunpack.c.h.b16 %v348
        %v428 = vunpack.c.l.b16 %v349
        %v429 = vunpack.c.h.b16 %v349
        %v430 = vunpack.c.l.b16 %v350
        %v431 = vunpack.c.h.b16 %v350
        %v432 = vunpack.c.l.b16 %v351
        %v433 = vunpack.c.h.b16 %v351
        %v434 = vunpack.c.l.b16 %v352
        %v435 = vunpack.c.h.b16 %v352
        %v436 = vunpack.c.l.b16 %v353
        %v437 = vunpack.c.h.b16 %v353
        %v438 = vunpack.c.l.b16 %v354
        %v439 = vunpack.c.h.b16 %v354
        %v440 = vunpack.c.l.b16 %v355
        %v441 = vunpack.c.h.b16 %v355
        %v442 = vunpack.c.l.b16 %v356
        %v443 = vunpack.c.h.b16 %v356
        %v444 = vunpack.c.l.b16 %v357
        %v445 = vunpack.c.h.b16 %v357
        %v446 = vunpack.c.l.b16 %v358
        %v447 = vunpack.c.h.b16 %v358
        %v448 = vunpack.c.l.b16 %v359
        %v449 = vunpack.c.h.b16 %v359
        %v450 = vunpack.c.l.b16 %v360
        %v451 = vunpack.c.h.b16 %v360
        %v452 = vunpack.c.l.b16 %v361
        %v453 = vunpack.c.h.b16 %v361
        %v454 = vunpack.c.l.b16 %v362
        %v455 = vunpack.c.h.b16 %v362
        %v456 = vunpack.c.l.b16 %v363
        %v457 = vunpack.c.h.b16 %v363
        %v458 = vunpack.c.l.b16 %v364
        %v459 = vunpack.c.h.b16 %v364
        %v460 = vunpack.c.l.b16 %v365
        %v461 = vunpack.c.h.b16 %v365
        %v462 = vunpack.c.l.b16 %v366
        %v463 = vunpack.c.h.b16 %v366
        %v464 = vunpack.c.l.b16 %v367
        %v465 = vunpack.c.h.b16 %v367
        %v466 = vunpack.c.l.b16 %v368
        %v467 = vunpack.c.h.b16 %v368
        %v468 = vunpack.c.l.b16 %v369
        %v469 = vunpack.c.h.b16 %v369
        %v470 = vunpack.c.l.b16 %v370
        %v471 = vunpack.c.h.b16 %v370
        %v472 = vunpack.c.l.b16 %v371
        %v473 = vunpack.c.h.b16 %v371
        %v474 = vunpack.c.l.b16 %v372
        %v475 = vunpack.c.h.b16 %v372
        %v476 = vunpack.c.l.b16 %v373
        %v477 = vunpack.c.h.b16 %v373
        %v478 = vunpack.c.l.b16 %v374
        %v479 = vunpack.c.h.b16 %v374
        %v480 = vunpack.c.l.b16 %v375
        %v481 = vunpack.c.h.b16 %v375
        %v482 = vpack.c.b16 %v420, %v418
        %v483 = vpack.c.b16 %v421, %v419
        %v484 = vpack.c.b16 %v424, %v422
        %v485 = vpack.c.b16 %v425, %v423
        %v486 = vpack.c.b16 %v428, %v426
        %v487 = vpack.c.b16 %v429, %v427
        %v488 = vpack.c.b16 %v432, %v430
        %v489 = vpack.c.b16 %v433, %v431
        %v490 = vpack.c.b16 %v436, %v434
        %v491 = vpack.c.b16 %v437, %v435
        %v492 = vpack.c.b16 %v440, %v438
        %v493 = vpack.c.b16 %v441, %v439
        %v494 = vpack.c.b16 %v444, %v442
        %v495 = vpack.c.b16 %v445, %v443
        %v496 = vpack.c.b16 %v448, %v446
        %v497 = vpack.c.b16 %v449, %v447
        %v498 = vpack.c.b16 %v452, %v450
        %v499 = vpack.c.b16 %v453, %v451
        %v500 = vpack.c.b16 %v456, %v454
        %v501 = vpack.c.b16 %v457, %v455
        %v502 = vpack.c.b16 %v460, %v458
        %v503 = vpack.c.b16 %v461, %v459
        %v504 = vpack.c.b16 %v464, %v462
        %v505 = vpack.c.b16 %v465, %v463
        %v506 = vpack.c.b16 %v468, %v466
        %v507 = vpack.c.b16 %v469, %v467
        %v508 = vpack.c.b16 %v472, %v470
        %v509 = vpack.c.b16 %v473, %v471
        %v510 = vpack.c.b16 %v476, %v474
        %v511 = vpack.c.b16 %v477, %v475
        %v512 = vpack.c.b16 %v480, %v478
        %v513 = vpack.c.b16 %v481, %v479
        %546 = vmatpush.bf16.msra.mxu0 %v496
        %547 = vmatpush.bf16.msra.mxu0 %v494
        %548 = vmatpush.bf16.msra.mxu0 %v492
        %549 = vmatpush.bf16.msra.mxu0 %v490
        %550 = vmatpush.bf16.msra.mxu0 %v488
        %551 = vmatpush.bf16.msra.mxu0 %v486
        %552 = vmatpush.bf16.msra.mxu0 %v484
        %553 = vmatpush.bf16.msra.mxu0 %v482
        %554 = vmatmul.bf16.gmra.mxu0 %v382
        %v555 = vpop.f32.mrf.mxu0
        %v556 = vadd.f32 0.0, %v555
        %v557 = vpop.f32.mrf.mxu0
        %v558 = vadd.f32 0.0, %v557
        %559 = vdwg.mxu0
        %560 = vmatpush.bf16.msra.mxu0 %v512
        %561 = vmatpush.bf16.msra.mxu0 %v510
        %562 = vmatpush.bf16.msra.mxu0 %v508
        %563 = vmatpush.bf16.msra.mxu0 %v506
        %564 = vmatpush.bf16.msra.mxu0 %v504
        %565 = vmatpush.bf16.msra.mxu0 %v502
        %566 = vmatpush.bf16.msra.mxu0 %v500
        %567 = vmatpush.bf16.msra.mxu0 %v498
        %568 = vmatmul.bf16.gmra.mxu0 %v383
        %v569 = vpop.f32.mrf.mxu0
        %v570 = vadd.f32 %v556, %v569
        %v571 = vpop.f32.mrf.mxu0
        %v572 = vadd.f32 %v558, %v571
        %573 = vdwg.mxu0
        %574 = vmatpush.bf16.msra.mxu0 %v497
        %575 = vmatpush.bf16.msra.mxu0 %v495
        %576 = vmatpush.bf16.msra.mxu0 %v493
        %577 = vmatpush.bf16.msra.mxu0 %v491
        %578 = vmatpush.bf16.msra.mxu0 %v489
        %579 = vmatpush.bf16.msra.mxu0 %v487
        %580 = vmatpush.bf16.msra.mxu0 %v485
        %581 = vmatpush.bf16.msra.mxu0 %v483
        %582 = vmatmul.bf16.gmra.mxu0 %v382
        %v583 = vpop.f32.mrf.mxu0
        %v584 = vadd.f32 0.0, %v583
        %v585 = vpop.f32.mrf.mxu0
        %v586 = vadd.f32 0.0, %v585
        %587 = vdwg.mxu0
        %588 = vmatpush.bf16.msra.mxu0 %v513
        %589 = vmatpush.bf16.msra.mxu0 %v511
        %590 = vmatpush.bf16.msra.mxu0 %v509
        %591 = vmatpush.bf16.msra.mxu0 %v507
        %592 = vmatpush.bf16.msra.mxu0 %v505
        %593 = vmatpush.bf16.msra.mxu0 %v503
        %594 = vmatpush.bf16.msra.mxu0 %v501
        %595 = vmatpush.bf16.msra.mxu0 %v499
        %596 = vmatmul.bf16.gmra.mxu0 %v383
        %v597 = vpop.f32.mrf.mxu0
        %v598 = vadd.f32 %v584, %v597
        %v599 = vpop.f32.mrf.mxu0
        %v600 = vadd.f32 %v586, %v599
        %601 = vdwg.mxu0
        %v602 = vld [vmem:[%s276] sm:$0xff]
        %v603 = vld [vmem:[%s276 + $0x8] sm:$0xff]
        %v604 = vld [vmem:[%s276 + $0x10] sm:$0xff]
        %v605 = vld [vmem:[%s276 + $0x18] sm:$0xff]
        %v606 = vld [vmem:[%s276 + $0x20] sm:$0xff]
        %v607 = vld [vmem:[%s276 + $0x28] sm:$0xff]
        %v608 = vld [vmem:[%s276 + $0x30] sm:$0xff]
        %v609 = vld [vmem:[%s276 + $0x38] sm:$0xff]
        %v610 = vld [vmem:[%s276 + $0x40] sm:$0xff]
        %v611 = vld [vmem:[%s276 + $0x48] sm:$0xff]
        %v612 = vld [vmem:[%s276 + $0x50] sm:$0xff]
        %v613 = vld [vmem:[%s276 + $0x58] sm:$0xff]
        %v614 = vld [vmem:[%s276 + $0x60] sm:$0xff]
        %v615 = vld [vmem:[%s276 + $0x68] sm:$0xff]
        %v616 = vld [vmem:[%s276 + $0x70] sm:$0xff]
        %v617 = vld [vmem:[%s276 + $0x78] sm:$0xff]
        %v618 = vld [vmem:[%s276 + $0x80] sm:$0xff]
        %v619 = vld [vmem:[%s276 + $0x88] sm:$0xff]
        %v620 = vld [vmem:[%s276 + $0x90] sm:$0xff]
        %v621 = vld [vmem:[%s276 + $0x98] sm:$0xff]
        %v622 = vld [vmem:[%s276 + $0xa0] sm:$0xff]
        %v623 = vld [vmem:[%s276 + $0xa8] sm:$0xff]
        %v624 = vld [vmem:[%s276 + $0xb0] sm:$0xff]
        %v625 = vld [vmem:[%s276 + $0xb8] sm:$0xff]
        %v626 = vld [vmem:[%s276 + $0xc0] sm:$0xff]
        %v627 = vld [vmem:[%s276 + $0xc8] sm:$0xff]
        %v628 = vld [vmem:[%s276 + $0xd0] sm:$0xff]
        %v629 = vld [vmem:[%s276 + $0xd8] sm:$0xff]
        %v630 = vld [vmem:[%s276 + $0xe0] sm:$0xff]
        %v631 = vld [vmem:[%s276 + $0xe8] sm:$0xff]
        %v632 = vld [vmem:[%s276 + $0xf0] sm:$0xff]
        %v633 = vld [vmem:[%s276 + $0xf8] sm:$0xff]
        %v666 = vunpack.c.l.b16 %v602
        %v667 = vunpack.c.h.b16 %v602
        %v668 = vunpack.c.l.b16 %v603
        %v669 = vunpack.c.h.b16 %v603
        %v670 = vunpack.c.l.b16 %v604
        %v671 = vunpack.c.h.b16 %v604
        %v672 = vunpack.c.l.b16 %v605
        %v673 = vunpack.c.h.b16 %v605
        %v674 = vunpack.c.l.b16 %v606
        %v675 = vunpack.c.h.b16 %v606
        %v676 = vunpack.c.l.b16 %v607
        %v677 = vunpack.c.h.b16 %v607
        %v678 = vunpack.c.l.b16 %v608
        %v679 = vunpack.c.h.b16 %v608
        %v680 = vunpack.c.l.b16 %v609
        %v681 = vunpack.c.h.b16 %v609
        %v682 = vunpack.c.l.b16 %v610
        %v683 = vunpack.c.h.b16 %v610
        %v684 = vunpack.c.l.b16 %v611
        %v685 = vunpack.c.h.b16 %v611
        %v686 = vunpack.c.l.b16 %v612
        %v687 = vunpack.c.h.b16 %v612
        %v688 = vunpack.c.l.b16 %v613
        %v689 = vunpack.c.h.b16 %v613
        %v690 = vunpack.c.l.b16 %v614
        %v691 = vunpack.c.h.b16 %v614
        %v692 = vunpack.c.l.b16 %v615
        %v693 = vunpack.c.h.b16 %v615
        %v694 = vunpack.c.l.b16 %v616
        %v695 = vunpack.c.h.b16 %v616
        %v696 = vunpack.c.l.b16 %v617
        %v697 = vunpack.c.h.b16 %v617
        %v698 = vunpack.c.l.b16 %v618
        %v699 = vunpack.c.h.b16 %v618
        %v700 = vunpack.c.l.b16 %v619
        %v701 = vunpack.c.h.b16 %v619
        %v702 = vunpack.c.l.b16 %v620
        %v703 = vunpack.c.h.b16 %v620
        %v704 = vunpack.c.l.b16 %v621
        %v705 = vunpack.c.h.b16 %v621
        %v706 = vunpack.c.l.b16 %v622
        %v707 = vunpack.c.h.b16 %v622
        %v708 = vunpack.c.l.b16 %v623
        %v709 = vunpack.c.h.b16 %v623
        %v710 = vunpack.c.l.b16 %v624
        %v711 = vunpack.c.h.b16 %v624
        %v712 = vunpack.c.l.b16 %v625
        %v713 = vunpack.c.h.b16 %v625
        %v714 = vunpack.c.l.b16 %v626
        %v715 = vunpack.c.h.b16 %v626
        %v716 = vunpack.c.l.b16 %v627
        %v717 = vunpack.c.h.b16 %v627
        %v718 = vunpack.c.l.b16 %v628
        %v719 = vunpack.c.h.b16 %v628
        %v720 = vunpack.c.l.b16 %v629
        %v721 = vunpack.c.h.b16 %v629
        %v722 = vunpack.c.l.b16 %v630
        %v723 = vunpack.c.h.b16 %v630
        %v724 = vunpack.c.l.b16 %v631
        %v725 = vunpack.c.h.b16 %v631
        %v726 = vunpack.c.l.b16 %v632
        %v727 = vunpack.c.h.b16 %v632
        %v728 = vunpack.c.l.b16 %v633
        %v729 = vunpack.c.h.b16 %v633
        %v730 = vpack.c.b16 %v668, %v666
        %v731 = vpack.c.b16 %v669, %v667
        %v732 = vpack.c.b16 %v672, %v670
        %v733 = vpack.c.b16 %v673, %v671
        %v734 = vpack.c.b16 %v676, %v674
        %v735 = vpack.c.b16 %v677, %v675
        %v736 = vpack.c.b16 %v680, %v678
        %v737 = vpack.c.b16 %v681, %v679
        %v738 = vpack.c.b16 %v684, %v682
        %v739 = vpack.c.b16 %v685, %v683
        %v740 = vpack.c.b16 %v688, %v686
        %v741 = vpack.c.b16 %v689, %v687
        %v742 = vpack.c.b16 %v692, %v690
        %v743 = vpack.c.b16 %v693, %v691
        %v744 = vpack.c.b16 %v696, %v694
        %v745 = vpack.c.b16 %v697, %v695
        %v746 = vpack.c.b16 %v700, %v698
        %v747 = vpack.c.b16 %v701, %v699
        %v748 = vpack.c.b16 %v704, %v702
        %v749 = vpack.c.b16 %v705, %v703
        %v750 = vpack.c.b16 %v708, %v706
        %v751 = vpack.c.b16 %v709, %v707
        %v752 = vpack.c.b16 %v712, %v710
        %v753 = vpack.c.b16 %v713, %v711
        %v754 = vpack.c.b16 %v716, %v714
        %v755 = vpack.c.b16 %v717, %v715
        %v756 = vpack.c.b16 %v720, %v718
        %v757 = vpack.c.b16 %v721, %v719
        %v758 = vpack.c.b16 %v724, %v722
        %v759 = vpack.c.b16 %v725, %v723
        %v760 = vpack.c.b16 %v728, %v726
        %v761 = vpack.c.b16 %v729, %v727
        %794 = vmatpush.bf16.msra.mxu0 %v744
        %795 = vmatpush.bf16.msra.mxu0 %v742
        %796 = vmatpush.bf16.msra.mxu0 %v740
        %797 = vmatpush.bf16.msra.mxu0 %v738
        %798 = vmatpush.bf16.msra.mxu0 %v736
        %799 = vmatpush.bf16.msra.mxu0 %v734
        %800 = vmatpush.bf16.msra.mxu0 %v732
        %801 = vmatpush.bf16.msra.mxu0 %v730
        %802 = vmatmul.bf16.gmra.mxu0 %v382
        %v803 = vpop.f32.mrf.mxu0
        %v804 = vadd.f32 0.0, %v803
        %v805 = vpop.f32.mrf.mxu0
        %v806 = vadd.f32 0.0, %v805
        %807 = vdwg.mxu0
        %808 = vmatpush.bf16.msra.mxu0 %v760
        %809 = vmatpush.bf16.msra.mxu0 %v758
        %810 = vmatpush.bf16.msra.mxu0 %v756
        %811 = vmatpush.bf16.msra.mxu0 %v754
        %812 = vmatpush.bf16.msra.mxu0 %v752
        %813 = vmatpush.bf16.msra.mxu0 %v750
        %814 = vmatpush.bf16.msra.mxu0 %v748
        %815 = vmatpush.bf16.msra.mxu0 %v746
        %816 = vmatmul.bf16.gmra.mxu0 %v383
        %v817 = vpop.f32.mrf.mxu0
        %v818 = vadd.f32 %v804, %v817
        %v819 = vpop.f32.mrf.mxu0
        %v820 = vadd.f32 %v806, %v819
        %821 = vdwg.mxu0
        %822 = vmatpush.bf16.msra.mxu0 %v745
        %823 = vmatpush.bf16.msra.mxu0 %v743
        %824 = vmatpush.bf16.msra.mxu0 %v741
        %825 = vmatpush.bf16.msra.mxu0 %v739
        %826 = vmatpush.bf16.msra.mxu0 %v737
        %827 = vmatpush.bf16.msra.mxu0 %v735
        %828 = vmatpush.bf16.msra.mxu0 %v733
        %829 = vmatpush.bf16.msra.mxu0 %v731
        %830 = vmatmul.bf16.gmra.mxu0 %v382
        %v831 = vpop.f32.mrf.mxu0
        %v832 = vadd.f32 0.0, %v831
        %v833 = vpop.f32.mrf.mxu0
        %v834 = vadd.f32 0.0, %v833
        %835 = vdwg.mxu0
        %836 = vmatpush.bf16.msra.mxu0 %v761
        %837 = vmatpush.bf16.msra.mxu0 %v759
        %838 = vmatpush.bf16.msra.mxu0 %v757
        %839 = vmatpush.bf16.msra.mxu0 %v755
        %840 = vmatpush.bf16.msra.mxu0 %v753
        %841 = vmatpush.bf16.msra.mxu0 %v751
        %842 = vmatpush.bf16.msra.mxu0 %v749
        %843 = vmatpush.bf16.msra.mxu0 %v747
        %844 = vmatmul.bf16.gmra.mxu0 %v383
        %v845 = vpop.f32.mrf.mxu0
        %v846 = vadd.f32 %v832, %v845
        %v847 = vpop.f32.mrf.mxu0
        %v848 = vadd.f32 %v834, %v847
        %849 = vdwg.mxu0
        %v850 = vxor.u32 %v570, 2147483648
        %v851 = vxor.u32 %v598, 2147483648
        %v852 = vxor.u32 %v572, 2147483648
        %v853 = vxor.u32 %v600, 2147483648
        %v854 = vmul.f32 %v850, 1.442695
        %v855 = vpow.pop %v854
        %v856 = vmul.f32 %v851, 1.442695
        %v857 = vpow.pop %v856
        %v858 = vmul.f32 %v852, 1.442695
        %v859 = vpow.pop %v858
        %v860 = vmul.f32 %v853, 1.442695
        %v861 = vpow.pop %v860
        %v862 = vadd.f32 %v855, 1.0
        %v863 = vadd.f32 %v857, 1.0
        %v864 = vadd.f32 %v859, 1.0
        %v865 = vadd.f32 %v861, 1.0
        %v866 = vrcp.pop %v862
        %v867 = vmul.f32 %v862, %v866
        %v868 = vsub.f32 1.0, %v867
        %v869 = vmul.f32 %v866, %v868
        %v870 = vadd.f32 %v866, %v869
        %vm871 = vweird.f32 %v862
        %vm872 = vweird.f32 %v866
        %vm873 = vmor %vm871, %vm872
        %v874 = vsel %vm873, %v866, %v870
        %v875 = vand.u32 2147483647, %v862
        %vm876 = vcmp.eq.f32.partialorder %v875, 8.507059e+37
        %v877 = vand.u32 %v862, 2147483648
        %v878 = vor.u32 1.1754944e-38, %v877
        %v879 = vsel %vm876, %v878, %v874
        %v880 = vmul.f32 1.0, %v879
        %v881 = vrcp.pop %v863
        %v882 = vmul.f32 %v863, %v881
        %v883 = vsub.f32 1.0, %v882
        %v884 = vmul.f32 %v881, %v883
        %v885 = vadd.f32 %v881, %v884
        %vm886 = vweird.f32 %v863
        %vm887 = vweird.f32 %v881
        %vm888 = vmor %vm886, %vm887
        %v889 = vsel %vm888, %v881, %v885
        %v890 = vand.u32 2147483647, %v863
        %vm891 = vcmp.eq.f32.partialorder %v890, 8.507059e+37
        %v892 = vand.u32 %v863, 2147483648
        %v893 = vor.u32 1.1754944e-38, %v892
        %v894 = vsel %vm891, %v893, %v889
        %v895 = vmul.f32 1.0, %v894
        %v896 = vrcp.pop %v864
        %v897 = vmul.f32 %v864, %v896
        %v898 = vsub.f32 1.0, %v897
        %v899 = vmul.f32 %v896, %v898
        %v900 = vadd.f32 %v896, %v899
        %vm901 = vweird.f32 %v864
        %vm902 = vweird.f32 %v896
        %vm903 = vmor %vm901, %vm902
        %v904 = vsel %vm903, %v896, %v900
        %v905 = vand.u32 2147483647, %v864
        %vm906 = vcmp.eq.f32.partialorder %v905, 8.507059e+37
        %v907 = vand.u32 %v864, 2147483648
        %v908 = vor.u32 1.1754944e-38, %v907
        %v909 = vsel %vm906, %v908, %v904
        %v910 = vmul.f32 1.0, %v909
        %v911 = vrcp.pop %v865
        %v912 = vmul.f32 %v865, %v911
        %v913 = vsub.f32 1.0, %v912
        %v914 = vmul.f32 %v911, %v913
        %v915 = vadd.f32 %v911, %v914
        %vm916 = vweird.f32 %v865
        %vm917 = vweird.f32 %v911
        %vm918 = vmor %vm916, %vm917
        %v919 = vsel %vm918, %v911, %v915
        %v920 = vand.u32 2147483647, %v865
        %vm921 = vcmp.eq.f32.partialorder %v920, 8.507059e+37
        %v922 = vand.u32 %v865, 2147483648
        %v923 = vor.u32 1.1754944e-38, %v922
        %v924 = vsel %vm921, %v923, %v919
        %v925 = vmul.f32 1.0, %v924
        %v926 = vmul.f32 %v570, %v880
        %v927 = vmul.f32 %v598, %v895
        %v928 = vmul.f32 %v572, %v910
        %v929 = vmul.f32 %v600, %v925
        %v930 = vmul.f32 %v926, %v818
        %v931 = vmul.f32 %v927, %v846
        %v932 = vmul.f32 %v928, %v820
        %v933 = vmul.f32 %v929, %v848
        %v934 = vld [vmem:[#allocation2] sm:$0xff]
        %v935 = vld [vmem:[#allocation2 + $0x8] sm:$0xff]
        %v936 = vld [vmem:[#allocation2 + $0x10] sm:$0xff]
        %v937 = vld [vmem:[#allocation2 + $0x18] sm:$0xff]
        %v938 = vpack.c.bf16 %v932, %v930
        %v939 = vpack.c.bf16 %v933, %v931
        %v940 = vld [vmem:[%s286] sm:$0xff]
        %v941 = vld [vmem:[%s286 + $0x8] sm:$0xff]
        %v942 = vld [vmem:[%s286 + $0x10] sm:$0xff]
        %v943 = vld [vmem:[%s286 + $0x18] sm:$0xff]
        %v944 = vld [vmem:[%s286 + $0x20] sm:$0xff]
        %v945 = vld [vmem:[%s286 + $0x28] sm:$0xff]
        %v946 = vld [vmem:[%s286 + $0x30] sm:$0xff]
        %v947 = vld [vmem:[%s286 + $0x38] sm:$0xff]
        %v948 = vld [vmem:[%s286 + $0x40] sm:$0xff]
        %v949 = vld [vmem:[%s286 + $0x48] sm:$0xff]
        %v950 = vld [vmem:[%s286 + $0x50] sm:$0xff]
        %v951 = vld [vmem:[%s286 + $0x58] sm:$0xff]
        %v952 = vld [vmem:[%s286 + $0x60] sm:$0xff]
        %v953 = vld [vmem:[%s286 + $0x68] sm:$0xff]
        %v954 = vld [vmem:[%s286 + $0x70] sm:$0xff]
        %v955 = vld [vmem:[%s286 + $0x78] sm:$0xff]
        %v956 = vld [vmem:[%s286 + $0x80] sm:$0xff]
        %v957 = vld [vmem:[%s286 + $0x88] sm:$0xff]
        %v958 = vld [vmem:[%s286 + $0x90] sm:$0xff]
        %v959 = vld [vmem:[%s286 + $0x98] sm:$0xff]
        %v960 = vld [vmem:[%s286 + $0xa0] sm:$0xff]
        %v961 = vld [vmem:[%s286 + $0xa8] sm:$0xff]
        %v962 = vld [vmem:[%s286 + $0xb0] sm:$0xff]
        %v963 = vld [vmem:[%s286 + $0xb8] sm:$0xff]
        %v964 = vld [vmem:[%s286 + $0xc0] sm:$0xff]
        %v965 = vld [vmem:[%s286 + $0xc8] sm:$0xff]
        %v966 = vld [vmem:[%s286 + $0xd0] sm:$0xff]
        %v967 = vld [vmem:[%s286 + $0xd8] sm:$0xff]
        %v968 = vld [vmem:[%s286 + $0xe0] sm:$0xff]
        %v969 = vld [vmem:[%s286 + $0xe8] sm:$0xff]
        %v970 = vld [vmem:[%s286 + $0xf0] sm:$0xff]
        %v971 = vld [vmem:[%s286 + $0xf8] sm:$0xff]
        %v1004 = vunpack.c.l.b16 %v940
        %v1005 = vunpack.c.h.b16 %v940
        %v1006 = vunpack.c.l.b16 %v941
        %v1007 = vunpack.c.h.b16 %v941
        %v1008 = vunpack.c.l.b16 %v942
        %v1009 = vunpack.c.h.b16 %v942
        %v1010 = vunpack.c.l.b16 %v943
        %v1011 = vunpack.c.h.b16 %v943
        %v1012 = vunpack.c.l.b16 %v944
        %v1013 = vunpack.c.h.b16 %v944
        %v1014 = vunpack.c.l.b16 %v945
        %v1015 = vunpack.c.h.b16 %v945
        %v1016 = vunpack.c.l.b16 %v946
        %v1017 = vunpack.c.h.b16 %v946
        %v1018 = vunpack.c.l.b16 %v947
        %v1019 = vunpack.c.h.b16 %v947
        %v1020 = vunpack.c.l.b16 %v948
        %v1021 = vunpack.c.h.b16 %v948
        %v1022 = vunpack.c.l.b16 %v949
        %v1023 = vunpack.c.h.b16 %v949
        %v1024 = vunpack.c.l.b16 %v950
        %v1025 = vunpack.c.h.b16 %v950
        %v1026 = vunpack.c.l.b16 %v951
        %v1027 = vunpack.c.h.b16 %v951
        %v1028 = vunpack.c.l.b16 %v952
        %v1029 = vunpack.c.h.b16 %v952
        %v1030 = vunpack.c.l.b16 %v953
        %v1031 = vunpack.c.h.b16 %v953
        %v1032 = vunpack.c.l.b16 %v954
        %v1033 = vunpack.c.h.b16 %v954
        %v1034 = vunpack.c.l.b16 %v955
        %v1035 = vunpack.c.h.b16 %v955
        %v1036 = vunpack.c.l.b16 %v956
        %v1037 = vunpack.c.h.b16 %v956
        %v1038 = vunpack.c.l.b16 %v957
        %v1039 = vunpack.c.h.b16 %v957
        %v1040 = vunpack.c.l.b16 %v958
        %v1041 = vunpack.c.h.b16 %v958
        %v1042 = vunpack.c.l.b16 %v959
        %v1043 = vunpack.c.h.b16 %v959
        %v1044 = vunpack.c.l.b16 %v960
        %v1045 = vunpack.c.h.b16 %v960
        %v1046 = vunpack.c.l.b16 %v961
        %v1047 = vunpack.c.h.b16 %v961
        %v1048 = vunpack.c.l.b16 %v962
        %v1049 = vunpack.c.h.b16 %v962
        %v1050 = vunpack.c.l.b16 %v963
        %v1051 = vunpack.c.h.b16 %v963
        %v1052 = vunpack.c.l.b16 %v964
        %v1053 = vunpack.c.h.b16 %v964
        %v1054 = vunpack.c.l.b16 %v965
        %v1055 = vunpack.c.h.b16 %v965
        %v1056 = vunpack.c.l.b16 %v966
        %v1057 = vunpack.c.h.b16 %v966
        %v1058 = vunpack.c.l.b16 %v967
        %v1059 = vunpack.c.h.b16 %v967
        %v1060 = vunpack.c.l.b16 %v968
        %v1061 = vunpack.c.h.b16 %v968
        %v1062 = vunpack.c.l.b16 %v969
        %v1063 = vunpack.c.h.b16 %v969
        %v1064 = vunpack.c.l.b16 %v970
        %v1065 = vunpack.c.h.b16 %v970
        %v1066 = vunpack.c.l.b16 %v971
        %v1067 = vunpack.c.h.b16 %v971
        %v1068 = vpack.c.b16 %v1006, %v1004
        %v1069 = vpack.c.b16 %v1007, %v1005
        %v1070 = vpack.c.b16 %v1010, %v1008
        %v1071 = vpack.c.b16 %v1011, %v1009
        %v1072 = vpack.c.b16 %v1014, %v1012
        %v1073 = vpack.c.b16 %v1015, %v1013
        %v1074 = vpack.c.b16 %v1018, %v1016
        %v1075 = vpack.c.b16 %v1019, %v1017
        %v1076 = vpack.c.b16 %v1022, %v1020
        %v1077 = vpack.c.b16 %v1023, %v1021
        %v1078 = vpack.c.b16 %v1026, %v1024
        %v1079 = vpack.c.b16 %v1027, %v1025
        %v1080 = vpack.c.b16 %v1030, %v1028
        %v1081 = vpack.c.b16 %v1031, %v1029
        %v1082 = vpack.c.b16 %v1034, %v1032
        %v1083 = vpack.c.b16 %v1035, %v1033
        %v1084 = vpack.c.b16 %v1038, %v1036
        %v1085 = vpack.c.b16 %v1039, %v1037
        %v1086 = vpack.c.b16 %v1042, %v1040
        %v1087 = vpack.c.b16 %v1043, %v1041
        %v1088 = vpack.c.b16 %v1046, %v1044
        %v1089 = vpack.c.b16 %v1047, %v1045
        %v1090 = vpack.c.b16 %v1050, %v1048
        %v1091 = vpack.c.b16 %v1051, %v1049
        %v1092 = vpack.c.b16 %v1054, %v1052
        %v1093 = vpack.c.b16 %v1055, %v1053
        %v1094 = vpack.c.b16 %v1058, %v1056
        %v1095 = vpack.c.b16 %v1059, %v1057
        %v1096 = vpack.c.b16 %v1062, %v1060
        %v1097 = vpack.c.b16 %v1063, %v1061
        %v1098 = vpack.c.b16 %v1066, %v1064
        %v1099 = vpack.c.b16 %v1067, %v1065
        %1132 = vmatpush.bf16.msra.mxu0 %v1082
        %1133 = vmatpush.bf16.msra.mxu0 %v1080
        %1134 = vmatpush.bf16.msra.mxu0 %v1078
        %1135 = vmatpush.bf16.msra.mxu0 %v1076
        %1136 = vmatpush.bf16.msra.mxu0 %v1074
        %1137 = vmatpush.bf16.msra.mxu0 %v1072
        %1138 = vmatpush.bf16.msra.mxu0 %v1070
        %1139 = vmatpush.bf16.msra.mxu0 %v1068
        %1140 = vmatmul.bf16.gmra.mxu0 %v938
        %v1141 = vpop.f32.mrf.mxu0
        %v1142 = vadd.f32 0.0, %v1141
        %v1143 = vpop.f32.mrf.mxu0
        %v1144 = vadd.f32 0.0, %v1143
        %1145 = vdwg.mxu0
        %1146 = vmatpush.bf16.msra.mxu0 %v1098
        %1147 = vmatpush.bf16.msra.mxu0 %v1096
        %1148 = vmatpush.bf16.msra.mxu0 %v1094
        %1149 = vmatpush.bf16.msra.mxu0 %v1092
        %1150 = vmatpush.bf16.msra.mxu0 %v1090
        %1151 = vmatpush.bf16.msra.mxu0 %v1088
        %1152 = vmatpush.bf16.msra.mxu0 %v1086
        %1153 = vmatpush.bf16.msra.mxu0 %v1084
        %1154 = vmatmul.bf16.gmra.mxu0 %v939
        %v1155 = vpop.f32.mrf.mxu0
        %v1156 = vadd.f32 %v1142, %v1155
        %v1157 = vpop.f32.mrf.mxu0
        %v1158 = vadd.f32 %v1144, %v1157
        %1159 = vdwg.mxu0
        %1160 = vmatpush.bf16.msra.mxu0 %v1083
        %1161 = vmatpush.bf16.msra.mxu0 %v1081
        %1162 = vmatpush.bf16.msra.mxu0 %v1079
        %1163 = vmatpush.bf16.msra.mxu0 %v1077
        %1164 = vmatpush.bf16.msra.mxu0 %v1075
        %1165 = vmatpush.bf16.msra.mxu0 %v1073
        %1166 = vmatpush.bf16.msra.mxu0 %v1071
        %1167 = vmatpush.bf16.msra.mxu0 %v1069
        %1168 = vmatmul.bf16.gmra.mxu0 %v938
        %v1169 = vpop.f32.mrf.mxu0
        %v1170 = vadd.f32 0.0, %v1169
        %v1171 = vpop.f32.mrf.mxu0
        %v1172 = vadd.f32 0.0, %v1171
        %1173 = vdwg.mxu0
        %1174 = vmatpush.bf16.msra.mxu0 %v1099
        %1175 = vmatpush.bf16.msra.mxu0 %v1097
        %1176 = vmatpush.bf16.msra.mxu0 %v1095
        %1177 = vmatpush.bf16.msra.mxu0 %v1093
        %1178 = vmatpush.bf16.msra.mxu0 %v1091
        %1179 = vmatpush.bf16.msra.mxu0 %v1089
        %1180 = vmatpush.bf16.msra.mxu0 %v1087
        %1181 = vmatpush.bf16.msra.mxu0 %v1085
        %1182 = vmatmul.bf16.gmra.mxu0 %v939
        %v1183 = vpop.f32.mrf.mxu0
        %v1184 = vadd.f32 %v1170, %v1183
        %v1185 = vpop.f32.mrf.mxu0
        %v1186 = vadd.f32 %v1172, %v1185
        %1187 = vdwg.mxu0
        %v1188 = vadd.f32 %v934, %v1156
        %v1189 = vadd.f32 %v935, %v1184
        %v1190 = vadd.f32 %v936, %v1158
        %v1191 = vadd.f32 %v937, %v1186
        %1192 = vst [vmem:[#allocation2] sm:$0xff] %v1188
        %1193 = vst [vmem:[#allocation2 + $0x8] sm:$0xff] %v1189
        %1194 = vst [vmem:[#allocation2 + $0x10] sm:$0xff] %v1190
        %1195 = vst [vmem:[#allocation2 + $0x18] sm:$0xff] %v1191
        %p1196 = scmp.eq.s32.totalorder %s27, 2
        // Predicated region
        $region53: #{feed_forward.1} parent=35 // pred_check
          %p1197 = pneg %p1196
        $region54: #{feed_forward.1} parent=35 // pred_check_branch
          %1199 = sbr.rel (%p1197) target = $region56
        $region55: #{feed_forward.1} parent=35 // pred_region
          %v1200 = vld [vmem:[#allocation2] sm:$0xff]
          %v1201 = vld [vmem:[#allocation2 + $0x8] sm:$0xff]
          %v1202 = vld [vmem:[#allocation2 + $0x10] sm:$0xff]
          %v1203 = vld [vmem:[#allocation2 + $0x18] sm:$0xff]
          %1204 = vst [vmem:[#allocation9] sm:$0xff] %v1200
          %1205 = vst [vmem:[#allocation9 + $0x8] sm:$0xff] %v1201
          %1206 = vst [vmem:[#allocation9 + $0x10] sm:$0xff] %v1202
          %1207 = vst [vmem:[#allocation9 + $0x18] sm:$0xff] %v1203
        $region56: #{feed_forward.1} parent=35 // pred_fallthru
          _
        // Predicated region
        $region57: #{feed_forward.1} parent=35 // pred_check
          %p1208 = pneg %p156
        $region58: #{feed_forward.1} parent=35 // pred_check_branch
          %1210 = sbr.rel (%p1208) target = $region60
        $region59: #{feed_forward.1} parent=35 // pred_region
          %s1211 = smul.u32 2, %s26
          %1213 = vsyncadd [#allocation5], 0
          %s1214 = smul.addr %s1211, 2
          %s1215 = smul.addr %s1214, 8
          %s1216 = scalar_lea.hbm %s4, %s1215
          %s1217 = sshll.u32 [#allocation9], 4
          %s1218 = int_to_ptr.vmem [resolvable:$true] %s1217
          %s1219 = sshll.u32 %s1216, 4
          %s1220 = int_to_ptr.hbm [resolvable:$true] %s1219
          %1225 = dma.vmem_to_hbm [thread:$0]  %s1218, 512, %s1220, [#allocation5], 256, 256, 16
        $region60: #{feed_forward.1} parent=35 // pred_fallthru
          _
        // Predicated region
        $region61: #{feed_forward.1} parent=35 // pred_check
          %p1226 = pneg %p156
        $region62: #{feed_forward.1} parent=35 // pred_check_branch
          %1228 = sbr.rel (%p1226) target = $region64
        $region63: #{feed_forward.1} parent=35 // pred_region
          %1230 = dma.done [#allocation5], 512
        $region64: #{feed_forward.1} parent=35 // pred_fallthru
          _
      $region36: #{feed_forward.1} parent=5 // pred_fallthru
        _
      %p1231 = scmp.le.s32.totalorder 2, %s17
      // Predicated region
      $region65: #{feed_forward.1} parent=5 // pred_check
        %p1232 = pneg %p1231
      $region66: #{feed_forward.1} parent=5 // pred_check_branch
        %1234 = sbr.rel (%p1232) target = $region68
      $region67: #{feed_forward.1} parent=5 // pred_region
        %s1235 = ssub.s32 %s17, 2
      $region68: #{feed_forward.1} parent=5 // pred_fallthru
        _
    $region6: #{feed_forward.1} parent=1 // loop_footer
      %s21 = sadd.s32 1, %s17
    $region7: #{feed_forward.1} parent=1 // loop_footer_branch
      %16 = sbr.rel target = $region3
    $region8: #{feed_forward.1} parent=1 // loop_exit
      _
    %1236 = vsyncpa [#allocation4], 1
    %s1237 = scalar_lea.sflag [#allocation4], 1
    %1238 = vsyncpa %s1237, 1
    %1239 = vsyncpa [#allocation7], 1
    %s1240 = scalar_lea.sflag [#allocation7], 1
    %1241 = vsyncpa %s1240, 1
    %1242 = vsyncpa [#allocation5], 1
    %s1243 = scalar_lea.sflag [#allocation5], 1
    %1244 = vsyncpa %s1243, 1

</llo_original>
